<compile_context>
chip_gen: v7x
topology: tpu7x:2x2x1
jax: 0.10.0
libtpu: 0.0.40
codegen_flags: <defaults>
</compile_context>

<pallas_src>
import functools

import jax
import jax.numpy as jnp
from jax import lax
from jax.experimental import pallas as pl
from jax.experimental.pallas import tpu as pltpu

_HIDDEN = 64        # logical hidden width of the PyTorch module
_HIDDEN_PAD = 128   # padded to one full lane width -> lane-dense fc1 output


def _round_up(x, m):
    return (x + m - 1) // m * m


def _bin_classifier_kernel(x_ref, w1_ref, b1_ref, w2_ref, b2_ref, o_ref):
    """One batch tile: x (TB, D) -> lane-dense output row (1, 1, TB)."""
    # fc1 on the MXU (f32 accumulate), bias + ReLU on the VPU.
    h = jnp.dot(x_ref[...], w1_ref[...], preferred_element_type=jnp.float32)
    h = jnp.maximum(h + b1_ref[...], 0.0)                      # (TB, Hp)
    # fc2: contract the hidden dim of w2 (1, Hp) against h (TB, Hp) so the
    # result lands directly as a lane-dense (1, TB) row -- avoids a (TB, 1)
    # column output (masked vst per sublane row) and any in-kernel transpose.
    out_row = lax.dot_general(
        w2_ref[...], h,
        dimension_numbers=(((1,), (1,)), ((), ())),
        preferred_element_type=jnp.float32)                    # (1, TB)
    o_ref[0] = (out_row + b2_ref[...]).astype(o_ref.dtype)


@functools.partial(jax.jit, static_argnames=("block_b",))
def bin_classifier_forward(x, w1, b1, w2, b2, *, block_b=1024):
    """Fused Linear(D->64) -> ReLU -> Linear(64->1), batch-tiled over a grid.

    x:  (B, D) float32
    w1: (D, 64) float32      b1: (1, 64) float32
    w2: (64, 1) float32      b2: (1, 1) float32
    returns: (B, 1) float32
    """
    B, D = x.shape
    H = w1.shape[1]
    Hp = _HIDDEN_PAD

    # Pad the hidden dim 64 -> 128 with zeros: fc1 output vregs become fully
    # lane-occupied; zero weight/bias columns keep the math identical and the
    # extra MXU columns are free (the kernel is HBM-bound on streaming x).
    w1p = jnp.zeros((D, Hp), jnp.float32).at[:, :H].set(w1.astype(jnp.float32))
    b1p = jnp.zeros((1, Hp), jnp.float32).at[:, :H].set(
        b1.reshape(1, H).astype(jnp.float32))
    w2p = jnp.zeros((1, Hp), jnp.float32).at[:, :H].set(
        w2.reshape(1, H).astype(jnp.float32))
    b2p = b2.reshape(1, 1).astype(jnp.float32)
    # TODO(synk): optionally cast x/w1 to bfloat16 here to halve HBM traffic
    # (kept f32 so the output matches the PyTorch module within f32 tolerance).

    # Batch tile: multiple of 128 (lane-dense output row + (8,128) block rule),
    # as large as possible to amortize the ~0.35us/step grid overhead, capped
    # so double-buffered x tiles stay well inside VMEM even on v7x
    # (64 MiB physical per TensorCore, 32 MiB scoped default).
    max_tb = max(128, ((24 << 20) // (8 * D)) // 128 * 128)
    TB = min(_round_up(block_b, 128), max_tb, _round_up(B, 128))
    Bp = _round_up(B, TB)
    num_tiles = Bp // TB

    xp = x.astype(jnp.float32)
    if Bp != B:
        xp = jnp.pad(xp, ((0, Bp - B), (0, 0)))

    # Explicit VMEM budget: double-buffered x tile + output rows + the
    # resident (constant index_map, DMA'd once) weights/biases, with headroom.
    need = 4 * (2 * TB * D + 2 * TB + D * Hp + 2 * Hp + 1)
    vmem_limit = int(min(max(2 * need + (4 << 20), 16 << 20), 48 << 20))

    grid_spec = pltpu.PrefetchScalarGridSpec(
        num_scalar_prefetch=0,
        grid=(num_tiles,),
        in_specs=[
            pl.BlockSpec((TB, D), lambda i: (i, 0)),    # streamed per tile
            pl.BlockSpec((D, Hp), lambda i: (0, 0)),    # resident weights
            pl.BlockSpec((1, Hp), lambda i: (0, 0)),    # resident bias 1
            pl.BlockSpec((1, Hp), lambda i: (0, 0)),    # resident fc2 row
            pl.BlockSpec((1, 1), lambda i: (0, 0)),     # resident bias 2
        ],
        out_specs=pl.BlockSpec((1, 1, TB), lambda i: (i, 0, 0)),
    )

    out_rows = pl.pallas_call(
        _bin_classifier_kernel,
        out_shape=jax.ShapeDtypeStruct((num_tiles, 1, TB), jnp.float32),
        grid_spec=grid_spec,
        compiler_params=pltpu.CompilerParams(
            # Batch tiles are independent -> megacore-shardable on v7x,
            # harmless on v5e/v6e.
            dimension_semantics=("parallel",),
            vmem_limit_bytes=vmem_limit,
        ),
    )(xp, w1p, b1p, w2p, b2p)

    # Lane-major (num_tiles, 1, TB) -> the (B, 1) column the module returns.
    return out_rows.reshape(Bp, 1)[:B]


def init_params(key, input_size, hidden=_HIDDEN):
    """Deterministic init mimicking nn.Linear's U(-1/sqrt(fan_in), +)."""
    k1, k2, k3, k4 = jax.random.split(key, 4)
    lim1 = 1.0 / jnp.sqrt(jnp.float32(input_size))
    lim2 = 1.0 / jnp.sqrt(jnp.float32(hidden))
    w1 = jax.random.uniform(k1, (input_size, hidden), jnp.float32, -lim1, lim1)
    b1 = jax.random.uniform(k2, (1, hidden), jnp.float32, -lim1, lim1)
    w2 = jax.random.uniform(k3, (hidden, 1), jnp.float32, -lim2, lim2)
    b2 = jax.random.uniform(k4, (1, 1), jnp.float32, -lim2, lim2)
    return w1, b1, w2, b2


if __name__ == "__main__":
    key = jax.random.PRNGKey(0)
    kx, kp = jax.random.split(key)

    batch = 8
    input_size = 32

    x = jax.random.normal(kx, (batch, input_size), jnp.float32)
    w1, b1, w2, b2 = init_params(kp, input_size)

    out = bin_classifier_forward(x, w1, b1, w2, b2)
    out = jax.block_until_ready(out)

    # Pure-JAX reference (same math as the PyTorch module).
    ref = jnp.maximum(x @ w1 + b1, 0.0) @ w2 + b2
    assert out.shape == (batch, 1)
    assert jnp.allclose(out, ref, atol=1e-5, rtol=1e-5), (
        float(jnp.max(jnp.abs(out - ref))))

    print("KERNEL_OK")
</pallas_src>

<mosaic_0001>
module attributes {stable_mosaic.version = 11 : i64} {
  func.func @_bin_classifier_kernel(%arg0: i32, %arg1: memref<128x32xf32, #tpu.memory_space<vmem>>, %arg2: memref<32x128xf32, #tpu.memory_space<vmem>>, %arg3: memref<1x128xf32, #tpu.memory_space<vmem>>, %arg4: memref<1x128xf32, #tpu.memory_space<vmem>>, %arg5: memref<1x1xf32, #tpu.memory_space<vmem>>, %arg6: memref<1x1x128xf32, #tpu.memory_space<vmem>>) attributes {dimension_semantics = [#tpu.dimension_semantics<parallel>], iteration_bounds = array<i64: 1>, scalar_prefetch = 0 : i64, scratch_operands = 0 : i64, tpu.core_type = #tpu.core_type<tc>, window_params = [{transform_indices = @transform_0, window_bounds = array<i64: 128, 32>}, {pipeline_mode = #tpu.pipeline_mode<synchronous>, transform_indices = @transform_1, window_bounds = array<i64: 32, 128>}, {pipeline_mode = #tpu.pipeline_mode<synchronous>, transform_indices = @transform_2, window_bounds = array<i64: 1, 128>}, {pipeline_mode = #tpu.pipeline_mode<synchronous>, transform_indices = @transform_3, window_bounds = array<i64: 1, 128>}, {pipeline_mode = #tpu.pipeline_mode<synchronous>, transform_indices = @transform_4, window_bounds = array<i64: 1, 1>}, {transform_indices = @transform_5, window_bounds = array<i64: 1, 1, 128>}]} {
    %c0 = arith.constant 0 : index
    %c0_0 = arith.constant 0 : index
    %0 = vector.load %arg1[%c0, %c0_0] : memref<128x32xf32, #tpu.memory_space<vmem>>, vector<128x32xf32>
    %c0_1 = arith.constant 0 : index
    %c0_2 = arith.constant 0 : index
    %1 = vector.load %arg2[%c0_1, %c0_2] : memref<32x128xf32, #tpu.memory_space<vmem>>, vector<32x128xf32>
    %cst = arith.constant dense<0.000000e+00> : vector<128x128xf32>
    %2 = tpu.matmul %0, %1, %cst {dimension_numbers = #tpu.dot_dimension_numbers<[1], [0], [0], [1], [0, 0, 1, 1], [], []>} : vector<128x32xf32>, vector<32x128xf32>, vector<128x128xf32> -> vector<128x128xf32>
    %c0_3 = arith.constant 0 : index
    %c0_4 = arith.constant 0 : index
    %3 = vector.load %arg3[%c0_3, %c0_4] : memref<1x128xf32, #tpu.memory_space<vmem>>, vector<1x128xf32>
    %4 = vector.broadcast %3 : vector<1x128xf32> to vector<128x128xf32>
    %5 = arith.addf %2, %4 : vector<128x128xf32>
    %cst_5 = arith.constant 0.000000e+00 : f32
    %6 = vector.broadcast %cst_5 : f32 to vector<128x128xf32>
    %7 = arith.maximumf %5, %6 : vector<128x128xf32>
    %c0_6 = arith.constant 0 : index
    %c0_7 = arith.constant 0 : index
    %8 = vector.load %arg4[%c0_6, %c0_7] : memref<1x128xf32, #tpu.memory_space<vmem>>, vector<1x128xf32>
    %cst_8 = arith.constant dense<0.000000e+00> : vector<1x128xf32>
    %9 = tpu.matmul %8, %7, %cst_8 {dimension_numbers = #tpu.dot_dimension_numbers<[1], [1], [0], [0], [0, 0, 1, 0], [], []>} : vector<1x128xf32>, vector<128x128xf32>, vector<1x128xf32> -> vector<1x128xf32>
    %c0_9 = arith.constant 0 : index
    %c0_10 = arith.constant 0 : index
    %10 = vector.load %arg5[%c0_9, %c0_10] : memref<1x1xf32, #tpu.memory_space<vmem>>, vector<1x1xf32>
    %11 = vector.broadcast %10 : vector<1x1xf32> to vector<1x128xf32>
    %12 = arith.addf %9, %11 : vector<1x128xf32>
    %c0_11 = arith.constant 0 : index
    %c0_12 = arith.constant 0 : index
    %c0_13 = arith.constant 0 : index
    %13 = vector.load %arg6[%c0_11, %c0_12, %c0_13] : memref<1x1x128xf32, #tpu.memory_space<vmem>>, vector<1x1x128xf32>
    %14 = vector.shape_cast %13 : vector<1x1x128xf32> to vector<1x128xf32>
    %15 = vector.shape_cast %12 : vector<1x128xf32> to vector<1x1x128xf32>
    tpu.vector_store %arg6[%c0_11, %c0_12, %c0_13], %15 {strides = array<i32>} : memref<1x1x128xf32, #tpu.memory_space<vmem>>, vector<1x1x128xf32>,
    return
  }
  func.func @transform_0(%arg0: i32) -> (i32, i32) {
    %c0_i32 = arith.constant 0 : i32
    %c0_i32_0 = arith.constant 0 : i32
    return %arg0, %c0_i32 : i32, i32
  }
  func.func @transform_1(%arg0: i32) -> (i32, i32) {
    %c0_i32 = arith.constant 0 : i32
    %c0_i32_0 = arith.constant 0 : i32
    %c0_i32_1 = arith.constant 0 : i32
    return %c0_i32, %c0_i32_0 : i32, i32
  }
  func.func @transform_2(%arg0: i32) -> (i32, i32) {
    %c0_i32 = arith.constant 0 : i32
    %c0_i32_0 = arith.constant 0 : i32
    %c0_i32_1 = arith.constant 0 : i32
    return %c0_i32, %c0_i32_0 : i32, i32
  }
  func.func @transform_3(%arg0: i32) -> (i32, i32) {
    %c0_i32 = arith.constant 0 : i32
    %c0_i32_0 = arith.constant 0 : i32
    %c0_i32_1 = arith.constant 0 : i32
    return %c0_i32, %c0_i32_0 : i32, i32
  }
  func.func @transform_4(%arg0: i32) -> (i32, i32) {
    %c0_i32 = arith.constant 0 : i32
    %c0_i32_0 = arith.constant 0 : i32
    %c0_i32_1 = arith.constant 0 : i32
    return %c0_i32, %c0_i32_0 : i32, i32
  }
  func.func @transform_5(%arg0: i32) -> (i32, i32, i32) {
    %c0_i32 = arith.constant 0 : i32
    %c0_i32_0 = arith.constant 0 : i32
    %c0_i32_1 = arith.constant 0 : i32
    return %arg0, %c0_i32, %c0_i32_0 : i32, i32, i32
  }
}

</mosaic_0001>

<llo_original>
// kernel: bin_classifier_forward.1
$region0: #{bin_classifier_forward.1}
  #allocation0 [shape = 'u32[]', space=smem, size = 0x4, offset = 0x4, fixed_abs, tag = 'smem constant byte address 0x4 - core index']
  #allocation1 [shape = 'u32[144,128]{1,0:T(1,128)}', space=vmem, size = 0x12000, scoped, tag = 'internal scratch']
  #allocation2 [shape = 'f32[1,1]{1,0:T(1,128)S(1)}', space=vmem, size = 0x200, scoped, tag = 'scoped memory for bin_classifier_forward.1']
  %s0 = inlined_call_operand.vmem [shape: f32[128,32], index: 0, kind: input, shape index: {}]
  %s1 = inlined_call_operand.vmem [shape: f32[32,128], index: 1, kind: input, shape index: {}]
  %s2 = inlined_call_operand.vmem [shape: f32[1,128], index: 2, kind: input, shape index: {}]
  %s3 = inlined_call_operand.vmem [shape: f32[1,128], index: 3, kind: input, shape index: {}]
  %s4 = inlined_call_operand.<no memory space> [shape: f32[1,1], index: 4, kind: input, shape index: {}]
  %s5 = inlined_call_operand.vmem [shape: f32[1,1,128], index: 5, kind: output, shape index: {}]
  %s6 = sld [smem:[#allocation0]]
  $region30: #{bin_classifier_forward.1} parent=0
    _
  %s8 = ssub.s32 1, %s6
  %s9 = scalar_select 0, %s8, %s6
  %v10 = vstv %s4
  %11 = vst [vmem:[#allocation2] sm:$0x1] %v10
  // Predicated region
  $region2: #{bin_classifier_forward.1} parent=0 // pred_check
    _
  $region3: #{bin_classifier_forward.1} parent=0 // pred_check_branch
    %13 = sbr.rel (0) target = $region5
  $region4: #{bin_classifier_forward.1} parent=0 // pred_region
    _
  $region5: #{bin_classifier_forward.1} parent=0 // pred_fallthru
    _
  // Predicated region
  $region6: #{bin_classifier_forward.1} parent=0 // pred_check
    _
  $region7: #{bin_classifier_forward.1} parent=0 // pred_check_branch
    %15 = sbr.rel (0) target = $region9
  $region8: #{bin_classifier_forward.1} parent=0 // pred_region
    _
  $region9: #{bin_classifier_forward.1} parent=0 // pred_fallthru
    _
  // Predicated region
  $region10: #{bin_classifier_forward.1} parent=0 // pred_check
    _
  $region11: #{bin_classifier_forward.1} parent=0 // pred_check_branch
    %17 = sbr.rel (0) target = $region13
  $region12: #{bin_classifier_forward.1} parent=0 // pred_region
    _
  $region13: #{bin_classifier_forward.1} parent=0 // pred_fallthru
    _
  // Predicated region
  $region14: #{bin_classifier_forward.1} parent=0 // pred_check
    _
  $region15: #{bin_classifier_forward.1} parent=0 // pred_check_branch
    %19 = sbr.rel (0) target = $region17
  $region16: #{bin_classifier_forward.1} parent=0 // pred_region
    _
  $region17: #{bin_classifier_forward.1} parent=0 // pred_fallthru
    _
  // Predicated region
  $region18: #{bin_classifier_forward.1} parent=0 // pred_check
    _
  $region19: #{bin_classifier_forward.1} parent=0 // pred_check_branch
    %21 = sbr.rel (0) target = $region21
  $region20: #{bin_classifier_forward.1} parent=0 // pred_region
    _
  $region21: #{bin_classifier_forward.1} parent=0 // pred_fallthru
    _
  %v22 = vld [vmem:[%s0] sm:$0xff]
  %v23 = vld [vmem:[%s0 + $0x8] sm:$0xff]
  %v24 = vld [vmem:[%s0 + $0x10] sm:$0xff]
  %v25 = vld [vmem:[%s0 + $0x18] sm:$0xff]
  %v26 = vld [vmem:[%s0 + $0x20] sm:$0xff]
  %v27 = vld [vmem:[%s0 + $0x28] sm:$0xff]
  %v28 = vld [vmem:[%s0 + $0x30] sm:$0xff]
  %v29 = vld [vmem:[%s0 + $0x38] sm:$0xff]
  %v30 = vld [vmem:[%s0 + $0x40] sm:$0xff]
  %v31 = vld [vmem:[%s0 + $0x48] sm:$0xff]
  %v32 = vld [vmem:[%s0 + $0x50] sm:$0xff]
  %v33 = vld [vmem:[%s0 + $0x58] sm:$0xff]
  %v34 = vld [vmem:[%s0 + $0x60] sm:$0xff]
  %v35 = vld [vmem:[%s0 + $0x68] sm:$0xff]
  %v36 = vld [vmem:[%s0 + $0x70] sm:$0xff]
  %v37 = vld [vmem:[%s0 + $0x78] sm:$0xff]
  %v38 = vld [vmem:[%s1] sm:$0xff]
  %v39 = vld [vmem:[%s1 + $0x8] sm:$0xff]
  %v40 = vld [vmem:[%s1 + $0x10] sm:$0xff]
  %v41 = vld [vmem:[%s1 + $0x18] sm:$0xff]
  %v42 = vld [vmem:[%s2] sm:$0x1]
  %v44 = vlaneseq
  %v45 = vshrl.u32 %v44, 7
  %v46 = vsub.s32 0, %v45
  %v47 = vrot.slane %v42, %v46
  %vm49 = vcmask 261120
  %v51 = vsel %vm49, %v22, 0
  %v54 = vsel %vm49, %v23, 0
  %v57 = vsel %vm49, %v24, 0
  %v60 = vsel %vm49, %v25, 0
  %v63 = vsel %vm49, %v26, 0
  %v66 = vsel %vm49, %v27, 0
  %v69 = vsel %vm49, %v28, 0
  %v72 = vsel %vm49, %v29, 0
  %v75 = vsel %vm49, %v30, 0
  %v78 = vsel %vm49, %v31, 0
  %v81 = vsel %vm49, %v32, 0
  %v84 = vsel %vm49, %v33, 0
  %v87 = vsel %vm49, %v34, 0
  %v90 = vsel %vm49, %v35, 0
  %v93 = vsel %vm49, %v36, 0
  %v96 = vsel %vm49, %v37, 0
  %98 = vmatprep.subr.mxu0 0.0
  %99 = vmatpush1.msra.mxu0 %v38
  %100 = vmatprep.subr.mxu0 0.0
  %101 = vmatpush1.msra.mxu0 %v39
  %102 = vmatprep.subr.mxu0 0.0
  %103 = vmatpush1.msra.mxu0 %v40
  %104 = vmatprep.subr.mxu0 0.0
  %105 = vmatpush1.msra.mxu0 %v41
  %106 = vmatprep.subr.mxu0 0.0
  %107 = vmatpush1.msra.mxu0 0.0
  %108 = vmatprep.subr.mxu0 0.0
  %109 = vmatpush1.msra.mxu0 0.0
  %110 = vmatprep.subr.mxu0 0.0
  %111 = vmatpush1.msra.mxu0 0.0
  %112 = vmatprep.subr.mxu0 0.0
  %113 = vmatpush1.msra.mxu0 0.0
  %114 = vmatprep.subr.mxu0 0.0
  %115 = vmatpush1.msra.mxu0 0.0
  %116 = vmatprep.subr.mxu0 0.0
  %117 = vmatpush1.msra.mxu0 0.0
  %118 = vmatprep.subr.mxu0 0.0
  %119 = vmatpush1.msra.mxu0 0.0
  %120 = vmatprep.subr.mxu0 0.0
  %121 = vmatpush1.msra.mxu0 0.0
  %122 = vmatprep.subr.mxu0 0.0
  %123 = vmatpush1.msra.mxu0 0.0
  %124 = vmatprep.subr.mxu0 0.0
  %125 = vmatpush1.msra.mxu0 0.0
  %126 = vmatprep.subr.mxu0 0.0
  %127 = vmatpush1.msra.mxu0 0.0
  %128 = vmatprep.subr.mxu0 0.0
  %129 = vmatpush1.msra.mxu0 0.0
  %130 = vmatprep.subr.mxu0 0.0
  %131 = vmatpush1.msra.mxu0 0.0
  %132 = vmatprep.subr.mxu0 0.0
  %133 = vmatpush1.msra.mxu0 0.0
  %134 = vmatprep.subr.mxu0 0.0
  %135 = vmatpush1.msra.mxu0 0.0
  %136 = vmatprep.subr.mxu0 0.0
  %137 = vmatpush1.msra.mxu0 0.0
  %138 = vmatprep.subr.mxu0 0.0
  %139 = vmatpush1.msra.mxu0 0.0
  %140 = vmatprep.subr.mxu0 0.0
  %141 = vmatpush1.msra.mxu0 0.0
  %142 = vmatprep.subr.mxu0 0.0
  %143 = vmatpush1.msra.mxu0 0.0
  %144 = vmatprep.subr.mxu0 0.0
  %145 = vmatpush1.msra.mxu0 0.0
  %146 = vmatprep.subr.mxu0 0.0
  %147 = vmatpush1.msra.mxu0 0.0
  %148 = vmatprep.subr.mxu0 0.0
  %149 = vmatpush1.msra.mxu0 0.0
  %150 = vmatprep.subr.mxu0 0.0
  %151 = vmatpush1.msra.mxu0 0.0
  %152 = vmatprep.subr.mxu0 0.0
  %153 = vmatpush1.msra.mxu0 0.0
  %154 = vmatprep.subr.mxu0 0.0
  %155 = vmatpush1.msra.mxu0 0.0
  %156 = vmatprep.subr.mxu0 0.0
  %157 = vmatpush1.msra.mxu0 0.0
  %158 = vmatprep.subr.mxu0 0.0
  %159 = vmatpush1.msra.mxu0 0.0
  %160 = vmatprep.subr.mxu0 0.0
  %161 = vmatpush1.msra.mxu0 0.0
  %162 = vmatprep.mubr.f32.mxu0 0.0
  %163 = vmatmul.mubr.f32.gmra.mrb[0].mxu0 %v51
  %v164 = vpop.f32.mrb[0].mxu0
  %v165 = vadd.f32 %v47, %v164
  %v166 = vpop.f32.mrb[0].mxu0
  %167 = vmatprep.mubr.f32.mxu0 0.0
  %168 = vmatmul.mubr.f32.gmra.mrb[0].mxu0 %v54
  %v169 = vpop.f32.mrb[0].mxu0
  %v170 = vadd.f32 %v47, %v169
  %v171 = vpop.f32.mrb[0].mxu0
  %172 = vmatprep.mubr.f32.mxu0 0.0
  %173 = vmatmul.mubr.f32.gmra.mrb[0].mxu0 %v57
  %v174 = vpop.f32.mrb[0].mxu0
  %v175 = vadd.f32 %v47, %v174
  %v176 = vpop.f32.mrb[0].mxu0
  %177 = vmatprep.mubr.f32.mxu0 0.0
  %178 = vmatmul.mubr.f32.gmra.mrb[0].mxu0 %v60
  %v179 = vpop.f32.mrb[0].mxu0
  %v180 = vadd.f32 %v47, %v179
  %v181 = vpop.f32.mrb[0].mxu0
  %182 = vmatprep.mubr.f32.mxu0 0.0
  %183 = vmatmul.mubr.f32.gmra.mrb[0].mxu0 %v63
  %v184 = vpop.f32.mrb[0].mxu0
  %v185 = vadd.f32 %v47, %v184
  %v186 = vpop.f32.mrb[0].mxu0
  %187 = vmatprep.mubr.f32.mxu0 0.0
  %188 = vmatmul.mubr.f32.gmra.mrb[0].mxu0 %v66
  %v189 = vpop.f32.mrb[0].mxu0
  %v190 = vadd.f32 %v47, %v189
  %v191 = vpop.f32.mrb[0].mxu0
  %192 = vmatprep.mubr.f32.mxu0 0.0
  %193 = vmatmul.mubr.f32.gmra.mrb[0].mxu0 %v69
  %v194 = vpop.f32.mrb[0].mxu0
  %v195 = vadd.f32 %v47, %v194
  %v196 = vpop.f32.mrb[0].mxu0
  %197 = vmatprep.mubr.f32.mxu0 0.0
  %198 = vmatmul.mubr.f32.gmra.mrb[0].mxu0 %v72
  %v199 = vpop.f32.mrb[0].mxu0
  %v200 = vadd.f32 %v47, %v199
  %v201 = vpop.f32.mrb[0].mxu0
  %202 = vmatprep.mubr.f32.mxu0 0.0
  %203 = vmatmul.mubr.f32.gmra.mrb[0].mxu0 %v75
  %v204 = vpop.f32.mrb[0].mxu0
  %v205 = vadd.f32 %v47, %v204
  %v206 = vpop.f32.mrb[0].mxu0
  %207 = vmatprep.mubr.f32.mxu0 0.0
  %208 = vmatmul.mubr.f32.gmra.mrb[0].mxu0 %v78
  %v209 = vpop.f32.mrb[0].mxu0
  %v210 = vadd.f32 %v47, %v209
  %v211 = vpop.f32.mrb[0].mxu0
  %212 = vmatprep.mubr.f32.mxu0 0.0
  %213 = vmatmul.mubr.f32.gmra.mrb[0].mxu0 %v81
  %v214 = vpop.f32.mrb[0].mxu0
  %v215 = vadd.f32 %v47, %v214
  %v216 = vpop.f32.mrb[0].mxu0
  %217 = vmatprep.mubr.f32.mxu0 0.0
  %218 = vmatmul.mubr.f32.gmra.mrb[0].mxu0 %v84
  %v219 = vpop.f32.mrb[0].mxu0
  %v220 = vadd.f32 %v47, %v219
  %v221 = vpop.f32.mrb[0].mxu0
  %222 = vmatprep.mubr.f32.mxu0 0.0
  %223 = vmatmul.mubr.f32.gmra.mrb[0].mxu0 %v87
  %v224 = vpop.f32.mrb[0].mxu0
  %v225 = vadd.f32 %v47, %v224
  %v226 = vpop.f32.mrb[0].mxu0
  %227 = vmatprep.mubr.f32.mxu0 0.0
  %228 = vmatmul.mubr.f32.gmra.mrb[0].mxu0 %v90
  %v229 = vpop.f32.mrb[0].mxu0
  %v230 = vadd.f32 %v47, %v229
  %v231 = vpop.f32.mrb[0].mxu0
  %232 = vmatprep.mubr.f32.mxu0 0.0
  %233 = vmatmul.mubr.f32.gmra.mrb[0].mxu0 %v93
  %v234 = vpop.f32.mrb[0].mxu0
  %v235 = vadd.f32 %v47, %v234
  %v236 = vpop.f32.mrb[0].mxu0
  %237 = vmatprep.mubr.f32.mxu0 0.0
  %238 = vmatmul.mubr.f32.gmra.mrb[0].mxu0 %v96
  %v239 = vpop.f32.mrb[0].mxu0
  %v240 = vadd.f32 %v47, %v239
  %v241 = vpop.f32.mrb[0].mxu0
  %242 = vdwg.mxu0
  %v243 = vmax.f32 %v165, 0.0
  %v244 = vmax.f32 %v170, 0.0
  %v245 = vmax.f32 %v175, 0.0
  %v246 = vmax.f32 %v180, 0.0
  %v247 = vmax.f32 %v185, 0.0
  %v248 = vmax.f32 %v190, 0.0
  %v249 = vmax.f32 %v195, 0.0
  %v250 = vmax.f32 %v200, 0.0
  %v251 = vmax.f32 %v205, 0.0
  %v252 = vmax.f32 %v210, 0.0
  %v253 = vmax.f32 %v215, 0.0
  %v254 = vmax.f32 %v220, 0.0
  %v255 = vmax.f32 %v225, 0.0
  %v256 = vmax.f32 %v230, 0.0
  %v257 = vmax.f32 %v235, 0.0
  %v258 = vmax.f32 %v240, 0.0
  %v259 = vld [vmem:[%s3] sm:$0x1]
  %v260 = vld [vmem:[#allocation2] sm:$0x1]
  %262 = vset.pattern.permute.xlu0 0
  %263 = vperm.xlu0 %262, %v260
  %v264 = vpop.permute.xlu0 %263
  %v266 = vlaneseq
  %v267 = vshrl.u32 %v266, 7
  %v268 = vsub.s32 0, %v267
  %v269 = vrot.slane %v264, %v268
  %270 = vmatprep.subr.mxu0 0.0
  %271 = vmatpush1.xpose.msra.mxu0 %v243
  %272 = vmatprep.subr.mxu0 0.0
  %273 = vmatpush1.xpose.msra.mxu0 %v244
  %274 = vmatprep.subr.mxu0 0.0
  %275 = vmatpush1.xpose.msra.mxu0 %v245
  %276 = vmatprep.subr.mxu0 0.0
  %277 = vmatpush1.xpose.msra.mxu0 %v246
  %278 = vmatprep.subr.mxu0 0.0
  %279 = vmatpush1.xpose.msra.mxu0 %v247
  %280 = vmatprep.subr.mxu0 0.0
  %281 = vmatpush1.xpose.msra.mxu0 %v248
  %282 = vmatprep.subr.mxu0 0.0
  %283 = vmatpush1.xpose.msra.mxu0 %v249
  %284 = vmatprep.subr.mxu0 0.0
  %285 = vmatpush1.xpose.msra.mxu0 %v250
  %286 = vmatprep.subr.mxu0 0.0
  %287 = vmatpush1.xpose.msra.mxu0 %v251
  %288 = vmatprep.subr.mxu0 0.0
  %289 = vmatpush1.xpose.msra.mxu0 %v252
  %290 = vmatprep.subr.mxu0 0.0
  %291 = vmatpush1.xpose.msra.mxu0 %v253
  %292 = vmatprep.subr.mxu0 0.0
  %293 = vmatpush1.xpose.msra.mxu0 %v254
  %294 = vmatprep.subr.mxu0 0.0
  %295 = vmatpush1.xpose.msra.mxu0 %v255
  %296 = vmatprep.subr.mxu0 0.0
  %297 = vmatpush1.xpose.msra.mxu0 %v256
  %298 = vmatprep.subr.mxu0 0.0
  %299 = vmatpush1.xpose.msra.mxu0 %v257
  %300 = vmatprep.subr.mxu0 0.0
  %301 = vmatpush1.xpose.msra.mxu0 %v258
  %302 = vmatprep.subr.mxu0 0.0
  %303 = vmatpush1.xpose.msra.mxu0 0.0
  %304 = vmatprep.subr.mxu0 0.0
  %305 = vmatpush1.xpose.msra.mxu0 0.0
  %306 = vmatprep.subr.mxu0 0.0
  %307 = vmatpush1.xpose.msra.mxu0 0.0
  %308 = vmatprep.subr.mxu0 0.0
  %309 = vmatpush1.xpose.msra.mxu0 0.0
  %310 = vmatprep.subr.mxu0 0.0
  %311 = vmatpush1.xpose.msra.mxu0 0.0
  %312 = vmatprep.subr.mxu0 0.0
  %313 = vmatpush1.xpose.msra.mxu0 0.0
  %314 = vmatprep.subr.mxu0 0.0
  %315 = vmatpush1.xpose.msra.mxu0 0.0
  %316 = vmatprep.subr.mxu0 0.0
  %317 = vmatpush1.xpose.msra.mxu0 0.0
  %318 = vmatprep.subr.mxu0 0.0
  %319 = vmatpush1.xpose.msra.mxu0 0.0
  %320 = vmatprep.subr.mxu0 0.0
  %321 = vmatpush1.xpose.msra.mxu0 0.0
  %322 = vmatprep.subr.mxu0 0.0
  %323 = vmatpush1.xpose.msra.mxu0 0.0
  %324 = vmatprep.subr.mxu0 0.0
  %325 = vmatpush1.xpose.msra.mxu0 0.0
  %326 = vmatprep.subr.mxu0 0.0
  %327 = vmatpush1.xpose.msra.mxu0 0.0
  %328 = vmatprep.subr.mxu0 0.0
  %329 = vmatpush1.xpose.msra.mxu0 0.0
  %330 = vmatprep.subr.mxu0 0.0
  %331 = vmatpush1.xpose.msra.mxu0 0.0
  %332 = vmatprep.subr.mxu0 0.0
  %333 = vmatpush1.xpose.msra.mxu0 0.0
  %334 = vmatprep.mubr.f32.mxu0 0.0
  %335 = vmatmul.mubr.f32.gmra.mrb[0].mxu0 %v259
  %v336 = vpop.f32.mrb[0].mxu0
  %v337 = vadd.f32 %v269, %v336
  %v338 = vpop.f32.mrb[0].mxu0
  %339 = vdwg.mxu0
  %340 = vst [vmem:[%s5] sm:$0x1] %v337
  // Predicated region
  $region22: #{bin_classifier_forward.1} parent=0 // pred_check
    _
  $region23: #{bin_classifier_forward.1} parent=0 // pred_check_branch
    %342 = sbr.rel (0) target = $region25
  $region24: #{bin_classifier_forward.1} parent=0 // pred_region
    _
  $region25: #{bin_classifier_forward.1} parent=0 // pred_fallthru
    _
  // Predicated region
  $region26: #{bin_classifier_forward.1} parent=0 // pred_check
    _
  $region27: #{bin_classifier_forward.1} parent=0 // pred_check_branch
    %344 = sbr.rel (0) target = $region29
  $region28: #{bin_classifier_forward.1} parent=0 // pred_region
    _
  $region29: #{bin_classifier_forward.1} parent=0 // pred_fallthru
    _

</llo_original>
